<compile_context>
chip_gen: v7x
topology: tpu7x:2x2x1
jax: 0.10.0
libtpu: 0.0.40
codegen_flags: <defaults>
</compile_context>

<pallas_src>
import functools
import numpy as np
import jax
import jax.numpy as jnp
from jax.experimental import pallas as pl
from jax.experimental.pallas import tpu as pltpu


# ----------------------------- Pallas kernel --------------------------------
def gat_kernel(x_ref, w1_ref, b1_ref, w2c_ref, b2c_ref, wsq_ref, bsq_ref,
               out_ref, *, bb, n, f, nhead):
    # x_ref block: (bb*n, Dp) -- bb batches of n nodes stacked on sublanes.
    # message MLP: Linear(D, F1) -> LeakyReLU(0.2) -> fused Linear(F1, F+H)
    h = jnp.dot(x_ref[...], w1_ref[...],
                preferred_element_type=jnp.float32) + b1_ref[...]
    h = jnp.where(h > 0, h, 0.2 * h)                          # LeakyReLU(0.2)

    # fused second layer: columns [:f] = fx, columns [f:] = neighbor-side
    # attention logits (src term + bias cancel under the softmax over nodes).
    fxd = jnp.dot(h, w2c_ref[...],
                  preferred_element_type=jnp.float32) + b2c_ref[...]  # (bb*n, F+H)
    fx3 = fxd[:, :f].reshape(bb, n, f)                        # (bb, n, F)
    dst = fxd[:, f:].reshape(bb, n, nhead)                    # (bb, n, H)

    # batched softmax over the neighbor/node axis (axis=1)
    m = jnp.max(dst, axis=1, keepdims=True)                   # (bb, 1, H)
    e = jnp.exp(dst - m)                                      # (bb, n, H)
    denom = jnp.sum(e, axis=1, keepdims=True)                 # (bb, 1, H)
    att = e * pl.reciprocal(denom, approx=True)               # (bb, n, H)

    # attention-weighted sum over nodes, per head, via VPU multiply + sublane
    # reduction (an (H,n)x(n,F) MXU matmul would be <2% utilized); heads are
    # lane-concatenated into a (bb, H*F) slab right before the squeeze matmul.
    hv = jnp.concatenate(
        [jnp.sum(att[:, :, hh:hh + 1] * fx3, axis=1) for hh in range(nhead)],
        axis=-1)                                              # (bb, H*F)

    # squeeze_back: single (bb, H*F) x (H*F, F) matmul, bias added on VPU
    out_ref[...] = jnp.dot(hv, wsq_ref[...],
                           preferred_element_type=jnp.float32) + bsq_ref[...]


# ------------------------------- wrapper -------------------------------------
def gat_layer_pallas(x, params, *, batch_block=None):
    w1, b1, w2, b2, wa_dst, wsq, bsq = params
    B, N, D = x.shape
    F = w2.shape[1]
    H = wa_dst.shape[1]

    if batch_block is None:
        batch_block = B        # grid=(1,): best on single-TC v5e/v6e
    assert B % batch_block == 0, "batch must divide evenly into blocks"
    assert batch_block == B or batch_block % 8 == 0, (
        "per-step output rows must stay 8-sublane aligned")
    grid = (B // batch_block,)

    # pad the input feature dim to a multiple of 8 (aligned K / input DMA)
    Dp = ((D + 7) // 8) * 8
    x2 = x.reshape(B * N, D)
    if Dp != D:
        x2 = jnp.pad(x2, ((0, 0), (0, Dp - D)))
        w1 = jnp.pad(w1, ((0, Dp - D), (0, 0)))

    # fuse the dst attention projection into the second MLP layer (wrapper-side
    # one-time prep, done at full precision)
    hi = jax.lax.Precision.HIGHEST
    w2c = jnp.concatenate([w2, jnp.dot(w2, wa_dst, precision=hi)], axis=1)  # (F1, F+H)
    b2c = jnp.concatenate([b2, jnp.dot(b2, wa_dst, precision=hi)], axis=1)  # (1, F+H)

    full = lambda a: pl.BlockSpec(a.shape, lambda i: (0,) * a.ndim)
    kernel = functools.partial(gat_kernel, bb=batch_block, n=N, f=F, nhead=H)

    rows = pl.pallas_call(
        kernel,
        out_shape=jax.ShapeDtypeStruct((B, F), jnp.float32),
        grid_spec=pltpu.PrefetchScalarGridSpec(
            num_scalar_prefetch=0,
            grid=grid,
            in_specs=[
                pl.BlockSpec((batch_block * N, Dp), lambda i: (i, 0)),   # x
                full(w1), full(b1), full(w2c), full(b2c),
                full(wsq), full(bsq),
            ],
            out_specs=pl.BlockSpec((batch_block, F), lambda i: (i, 0)),
        ),
        compiler_params=pltpu.CompilerParams(
            dimension_semantics=("parallel",)),
    )(x2, w1, b1, w2c, b2c, wsq, bsq)

    # the per-batch output row is identical for every query node (exact; see
    # header) -- broadcast in the wrapper instead of storing N copies.
    return jnp.broadcast_to(rows[:, None, :], (B, N, F))


# --------------------------- pure-JAX reference -------------------------------
# Faithful transcription of the PyTorch forward (builds the full (B,N,N,2F)
# fx_cat, applies the attention Linear incl. src term + bias, Softmax(dim=2)).
def gat_layer_reference(x, params):
    w1, b1, w2, b2, wa, ba, wsq, bsq = params
    h = x @ w1 + b1
    h = jnp.where(h > 0, h, 0.2 * h)
    fx = h @ w2 + b2                                                # (B, N, F)
    B, N, F = fx.shape
    fx_cat = jnp.concatenate(
        [jnp.broadcast_to(fx[:, :, None, :], (B, N, N, F)),
         jnp.broadcast_to(fx[:, None, :, :], (B, N, N, F))], axis=-1)
    att = fx_cat @ wa + ba[0]                                       # (B, N, N, H)
    att = jax.nn.softmax(att, axis=2)
    outs = [jnp.einsum('bjk,bkf->bjf', att[..., hh], fx)
            for hh in range(att.shape[-1])]
    cat = jnp.concatenate(outs, axis=-1)                            # (B, N, H*F)
    return cat @ wsq + bsq


# ------------------------------ param init ------------------------------------
def linear_params(key, fan_in, fan_out):
    k1, k2 = jax.random.split(key)
    bound = fan_in ** -0.5
    w = jax.random.uniform(k1, (fan_in, fan_out), jnp.float32, -bound, bound)
    b = jax.random.uniform(k2, (1, fan_out), jnp.float32, -bound, bound)
    return w, b


if __name__ == "__main__":
    B, N, D = 8, 8, 7          # batch, nodes, input features
    F1, F, H = 32, 32, 2       # MSG.STRUCTURE = [32, 32], AGG.NHEAD = 2

    key = jax.random.PRNGKey(0)
    kx, k1, k2, k3, k4 = jax.random.split(key, 5)

    x = jax.random.normal(kx, (B, N, D), jnp.float32)

    w1, b1 = linear_params(k1, D, F1)            # msg_fc_1
    w2, b2 = linear_params(k2, F1, F)            # msg_fc_2 (last, no activation)
    wa, ba = linear_params(k3, 2 * F, H)         # attention Linear(2F, H)
    wa_dst = wa[F:, :]                           # (F, H) neighbor-side half
    wsq, bsq = linear_params(k4, H * F, F)       # squeeze_back

    kern_params = (w1, b1, w2, b2, wa_dst, wsq, bsq)
    ref_params = (w1, b1, w2, b2, wa, ba, wsq, bsq)

    out = gat_layer_pallas(x, kern_params)       # default: grid=(1,)
    jax.block_until_ready(out)
    ref = gat_layer_reference(x, ref_params)
    jax.block_until_ready(ref)

    # Tolerance covers default (single bf16 pass) MXU precision in both the
    # kernel and the XLA reference path, the restructured (fused) dst
    # projection, and the approx-reciprocal softmax normalization.  Algebraic
    # errors would show up at the O(0.1) level.
    np.testing.assert_allclose(np.asarray(out), np.asarray(ref),
                               rtol=5e-3, atol=5e-3)
    print("KERNEL_OK")
</pallas_src>

<mosaic_0001>
module attributes {stable_mosaic.version = 11 : i64} {
  func.func @gat_kernel(%arg0: i32, %arg1: memref<64x8xf32, #tpu.memory_space<vmem>>, %arg2: memref<8x32xf32, #tpu.memory_space<vmem>>, %arg3: memref<1x32xf32, #tpu.memory_space<vmem>>, %arg4: memref<32x34xf32, #tpu.memory_space<vmem>>, %arg5: memref<1x34xf32, #tpu.memory_space<vmem>>, %arg6: memref<64x32xf32, #tpu.memory_space<vmem>>, %arg7: memref<1x32xf32, #tpu.memory_space<vmem>>, %arg8: memref<8x32xf32, #tpu.memory_space<vmem>>) attributes {dimension_semantics = [#tpu.dimension_semantics<parallel>], iteration_bounds = array<i64: 1>, scalar_prefetch = 0 : i64, scratch_operands = 0 : i64, tpu.core_type = #tpu.core_type<tc>, window_params = [{transform_indices = @transform_0, window_bounds = array<i64: 64, 8>}, {pipeline_mode = #tpu.pipeline_mode<synchronous>, transform_indices = @transform_1, window_bounds = array<i64: 8, 32>}, {pipeline_mode = #tpu.pipeline_mode<synchronous>, transform_indices = @transform_2, window_bounds = array<i64: 1, 32>}, {pipeline_mode = #tpu.pipeline_mode<synchronous>, transform_indices = @transform_3, window_bounds = array<i64: 32, 34>}, {pipeline_mode = #tpu.pipeline_mode<synchronous>, transform_indices = @transform_4, window_bounds = array<i64: 1, 34>}, {pipeline_mode = #tpu.pipeline_mode<synchronous>, transform_indices = @transform_5, window_bounds = array<i64: 64, 32>}, {pipeline_mode = #tpu.pipeline_mode<synchronous>, transform_indices = @transform_6, window_bounds = array<i64: 1, 32>}, {transform_indices = @transform_7, window_bounds = array<i64: 8, 32>}]} {
    %c0 = arith.constant 0 : index
    %c0_0 = arith.constant 0 : index
    %0 = vector.load %arg1[%c0, %c0_0] : memref<64x8xf32, #tpu.memory_space<vmem>>, vector<64x8xf32>
    %c0_1 = arith.constant 0 : index
    %c0_2 = arith.constant 0 : index
    %1 = vector.load %arg2[%c0_1, %c0_2] : memref<8x32xf32, #tpu.memory_space<vmem>>, vector<8x32xf32>
    %cst = arith.constant dense<0.000000e+00> : vector<64x32xf32>
    %2 = tpu.matmul %0, %1, %cst {dimension_numbers = #tpu.dot_dimension_numbers<[1], [0], [0], [1], [0, 0, 1, 1], [], []>} : vector<64x8xf32>, vector<8x32xf32>, vector<64x32xf32> -> vector<64x32xf32>
    %c0_3 = arith.constant 0 : index
    %c0_4 = arith.constant 0 : index
    %3 = vector.load %arg3[%c0_3, %c0_4] : memref<1x32xf32, #tpu.memory_space<vmem>>, vector<1x32xf32>
    %4 = vector.broadcast %3 : vector<1x32xf32> to vector<64x32xf32>
    %5 = arith.addf %2, %4 : vector<64x32xf32>
    %cst_5 = arith.constant 0.000000e+00 : f32
    %6 = vector.broadcast %cst_5 : f32 to vector<64x32xf32>
    %7 = arith.cmpf ogt, %5, %6 : vector<64x32xf32>
    %cst_6 = arith.constant 2.000000e-01 : f32
    %8 = vector.broadcast %cst_6 : f32 to vector<64x32xf32>
    %9 = arith.mulf %8, %5 : vector<64x32xf32>
    %10 = arith.select %7, %5, %9 : vector<64x32xi1>, vector<64x32xf32>
    %c0_7 = arith.constant 0 : index
    %c0_8 = arith.constant 0 : index
    %11 = vector.load %arg4[%c0_7, %c0_8] : memref<32x34xf32, #tpu.memory_space<vmem>>, vector<32x34xf32>
    %cst_9 = arith.constant dense<0.000000e+00> : vector<64x34xf32>
    %12 = tpu.matmul %10, %11, %cst_9 {dimension_numbers = #tpu.dot_dimension_numbers<[1], [0], [0], [1], [0, 0, 1, 1], [], []>} : vector<64x32xf32>, vector<32x34xf32>, vector<64x34xf32> -> vector<64x34xf32>
    %c0_10 = arith.constant 0 : index
    %c0_11 = arith.constant 0 : index
    %13 = vector.load %arg5[%c0_10, %c0_11] : memref<1x34xf32, #tpu.memory_space<vmem>>, vector<1x34xf32>
    %14 = vector.broadcast %13 : vector<1x34xf32> to vector<64x34xf32>
    %15 = arith.addf %12, %14 : vector<64x34xf32>
    %16 = vector.extract_strided_slice %15 {offsets = [0, 0], sizes = [64, 32], strides = [1, 1]} : vector<64x34xf32> to vector<64x32xf32>
    %17 = vector.shape_cast %16 : vector<64x32xf32> to vector<8x8x32xf32>
    %18 = vector.extract_strided_slice %15 {offsets = [0, 32], sizes = [64, 2], strides = [1, 1]} : vector<64x34xf32> to vector<64x2xf32>
    %19 = vector.shape_cast %18 : vector<64x2xf32> to vector<8x8x2xf32>
    %cst_12 = arith.constant dense<0xFF800000> : vector<8x2xf32>
    %20 = vector.multi_reduction <maximumf>, %19, %cst_12 [1] : vector<8x8x2xf32> to vector<8x2xf32>
    %21 = vector.shape_cast %20 : vector<8x2xf32> to vector<8x1x2xf32>
    %22 = vector.broadcast %21 : vector<8x1x2xf32> to vector<8x8x2xf32>
    %23 = arith.subf %19, %22 : vector<8x8x2xf32>
    %24 = math.exp %23 : vector<8x8x2xf32>
    %cst_13 = arith.constant dense<0.000000e+00> : vector<8x2xf32>
    %25 = vector.multi_reduction <add>, %24, %cst_13 [1] : vector<8x8x2xf32> to vector<8x2xf32>
    %26 = vector.shape_cast %25 : vector<8x2xf32> to vector<8x1x2xf32>
    %27 = tpu.reciprocal %26 {approx = true} : vector<8x1x2xf32> -> vector<8x1x2xf32>
    %28 = vector.broadcast %27 : vector<8x1x2xf32> to vector<8x8x2xf32>
    %29 = arith.mulf %24, %28 : vector<8x8x2xf32>
    %30 = vector.extract_strided_slice %29 {offsets = [0, 0, 0], sizes = [8, 8, 1], strides = [1, 1, 1]} : vector<8x8x2xf32> to vector<8x8x1xf32>
    %31 = vector.broadcast %30 : vector<8x8x1xf32> to vector<8x8x32xf32>
    %32 = arith.mulf %31, %17 : vector<8x8x32xf32>
    %cst_14 = arith.constant dense<0.000000e+00> : vector<8x32xf32>
    %33 = vector.multi_reduction <add>, %32, %cst_14 [1] : vector<8x8x32xf32> to vector<8x32xf32>
    %34 = vector.extract_strided_slice %29 {offsets = [0, 0, 1], sizes = [8, 8, 1], strides = [1, 1, 1]} : vector<8x8x2xf32> to vector<8x8x1xf32>
    %35 = vector.broadcast %34 : vector<8x8x1xf32> to vector<8x8x32xf32>
    %36 = arith.mulf %35, %17 : vector<8x8x32xf32>
    %cst_15 = arith.constant dense<0.000000e+00> : vector<8x32xf32>
    %37 = vector.multi_reduction <add>, %36, %cst_15 [1] : vector<8x8x32xf32> to vector<8x32xf32>
    %38 = tpu.concatenate %33, %37 in 1 : vector<8x32xf32>, vector<8x32xf32> -> vector<8x64xf32>
    %c0_16 = arith.constant 0 : index
    %c0_17 = arith.constant 0 : index
    %39 = vector.load %arg6[%c0_16, %c0_17] : memref<64x32xf32, #tpu.memory_space<vmem>>, vector<64x32xf32>
    %cst_18 = arith.constant dense<0.000000e+00> : vector<8x32xf32>
    %40 = tpu.matmul %38, %39, %cst_18 {dimension_numbers = #tpu.dot_dimension_numbers<[1], [0], [0], [1], [0, 0, 1, 1], [], []>} : vector<8x64xf32>, vector<64x32xf32>, vector<8x32xf32> -> vector<8x32xf32>
    %c0_19 = arith.constant 0 : index
    %c0_20 = arith.constant 0 : index
    %41 = vector.load %arg7[%c0_19, %c0_20] : memref<1x32xf32, #tpu.memory_space<vmem>>, vector<1x32xf32>
    %42 = vector.broadcast %41 : vector<1x32xf32> to vector<8x32xf32>
    %43 = arith.addf %40, %42 : vector<8x32xf32>
    %c0_21 = arith.constant 0 : index
    %c0_22 = arith.constant 0 : index
    %44 = vector.load %arg8[%c0_21, %c0_22] : memref<8x32xf32, #tpu.memory_space<vmem>>, vector<8x32xf32>
    tpu.vector_store %arg8[%c0_21, %c0_22], %43 {strides = array<i32>} : memref<8x32xf32, #tpu.memory_space<vmem>>, vector<8x32xf32>,
    return
  }
  func.func @transform_0(%arg0: i32) -> (i32, i32) {
    %c0_i32 = arith.constant 0 : i32
    %c0_i32_0 = arith.constant 0 : i32
    return %arg0, %c0_i32 : i32, i32
  }
  func.func @transform_1(%arg0: i32) -> (i32, i32) {
    %c0_i32 = arith.constant 0 : i32
    %c0_i32_0 = arith.constant 0 : i32
    %c0_i32_1 = arith.constant 0 : i32
    return %c0_i32, %c0_i32_0 : i32, i32
  }
  func.func @transform_2(%arg0: i32) -> (i32, i32) {
    %c0_i32 = arith.constant 0 : i32
    %c0_i32_0 = arith.constant 0 : i32
    %c0_i32_1 = arith.constant 0 : i32
    return %c0_i32, %c0_i32_0 : i32, i32
  }
  func.func @transform_3(%arg0: i32) -> (i32, i32) {
    %c0_i32 = arith.constant 0 : i32
    %c0_i32_0 = arith.constant 0 : i32
    %c0_i32_1 = arith.constant 0 : i32
    return %c0_i32, %c0_i32_0 : i32, i32
  }
  func.func @transform_4(%arg0: i32) -> (i32, i32) {
    %c0_i32 = arith.constant 0 : i32
    %c0_i32_0 = arith.constant 0 : i32
    %c0_i32_1 = arith.constant 0 : i32
    return %c0_i32, %c0_i32_0 : i32, i32
  }
  func.func @transform_5(%arg0: i32) -> (i32, i32) {
    %c0_i32 = arith.constant 0 : i32
    %c0_i32_0 = arith.constant 0 : i32
    %c0_i32_1 = arith.constant 0 : i32
    return %c0_i32, %c0_i32_0 : i32, i32
  }
  func.func @transform_6(%arg0: i32) -> (i32, i32) {
    %c0_i32 = arith.constant 0 : i32
    %c0_i32_0 = arith.constant 0 : i32
    %c0_i32_1 = arith.constant 0 : i32
    return %c0_i32, %c0_i32_0 : i32, i32
  }
  func.func @transform_7(%arg0: i32) -> (i32, i32) {
    %c0_i32 = arith.constant 0 : i32
    %c0_i32_0 = arith.constant 0 : i32
    return %arg0, %c0_i32 : i32, i32
  }
}

</mosaic_0001>

<llo_original>
// kernel: tpu_custom_call.1
$region0: #{tpu_custom_call.1}
  #allocation0 [shape = 'u32[]', space=smem, size = 0x4, offset = 0x4, fixed_abs, tag = 'smem constant byte address 0x4 - core index']
  #allocation1 [shape = 'u32[144,128]{1,0:T(1,128)}', space=vmem, size = 0x12000, scoped, tag = 'internal scratch']
  %s0 = inlined_call_operand.vmem [shape: f32[64,8], index: 0, kind: input, shape index: {}]
  %s1 = inlined_call_operand.vmem [shape: f32[8,32], index: 1, kind: input, shape index: {}]
  %s2 = inlined_call_operand.vmem [shape: f32[1,32], index: 2, kind: input, shape index: {}]
  %s3 = inlined_call_operand.vmem [shape: f32[32,34], index: 3, kind: input, shape index: {}]
  %s4 = inlined_call_operand.vmem [shape: f32[1,34], index: 4, kind: input, shape index: {}]
  %s5 = inlined_call_operand.vmem [shape: f32[64,32], index: 5, kind: input, shape index: {}]
  %s6 = inlined_call_operand.vmem [shape: f32[1,32], index: 6, kind: input, shape index: {}]
  %s7 = inlined_call_operand.hbm [shape: f32[8,32], index: 7, kind: output, shape index: {}]
  %s8 = sld [smem:[#allocation0]]
  $region38: #{tpu_custom_call.1} parent=0
    _
  %s10 = ssub.s32 1, %s8
  %s11 = scalar_select 0, %s10, %s8
  $region1: #{tpu_custom_call.1} parent=0
    #allocation2 [shape = 'u8[4096]{0}', space=vmem, size = 0x1000, scoped, tag = 'output window, operand 0, single buffered']
    #allocation3 [shape = 's32[1]{0}', space=sflag, size = 0x4, scoped, tag = 'scoped memory for tpu_custom_call.1']
    %12 = vsyncpa [#allocation3], 0
    // Predicated region
    $region2: #{tpu_custom_call.1} parent=1 // pred_check
      _
    $region3: #{tpu_custom_call.1} parent=1 // pred_check_branch
      %14 = sbr.rel (0) target = $region5
    $region4: #{tpu_custom_call.1} parent=1 // pred_region
      _
    $region5: #{tpu_custom_call.1} parent=1 // pred_fallthru
      _
    // Predicated region
    $region6: #{tpu_custom_call.1} parent=1 // pred_check
      _
    $region7: #{tpu_custom_call.1} parent=1 // pred_check_branch
      %16 = sbr.rel (0) target = $region9
    $region8: #{tpu_custom_call.1} parent=1 // pred_region
      _
    $region9: #{tpu_custom_call.1} parent=1 // pred_fallthru
      _
    // Predicated region
    $region10: #{tpu_custom_call.1} parent=1 // pred_check
      _
    $region11: #{tpu_custom_call.1} parent=1 // pred_check_branch
      %18 = sbr.rel (0) target = $region13
    $region12: #{tpu_custom_call.1} parent=1 // pred_region
      _
    $region13: #{tpu_custom_call.1} parent=1 // pred_fallthru
      _
    // Predicated region
    $region14: #{tpu_custom_call.1} parent=1 // pred_check
      _
    $region15: #{tpu_custom_call.1} parent=1 // pred_check_branch
      %20 = sbr.rel (0) target = $region17
    $region16: #{tpu_custom_call.1} parent=1 // pred_region
      _
    $region17: #{tpu_custom_call.1} parent=1 // pred_fallthru
      _
    // Predicated region
    $region18: #{tpu_custom_call.1} parent=1 // pred_check
      _
    $region19: #{tpu_custom_call.1} parent=1 // pred_check_branch
      %22 = sbr.rel (0) target = $region21
    $region20: #{tpu_custom_call.1} parent=1 // pred_region
      _
    $region21: #{tpu_custom_call.1} parent=1 // pred_fallthru
      _
    // Predicated region
    $region22: #{tpu_custom_call.1} parent=1 // pred_check
      _
    $region23: #{tpu_custom_call.1} parent=1 // pred_check_branch
      %24 = sbr.rel (0) target = $region25
    $region24: #{tpu_custom_call.1} parent=1 // pred_region
      _
    $region25: #{tpu_custom_call.1} parent=1 // pred_fallthru
      _
    // Predicated region
    $region26: #{tpu_custom_call.1} parent=1 // pred_check
      _
    $region27: #{tpu_custom_call.1} parent=1 // pred_check_branch
      %26 = sbr.rel (0) target = $region29
    $region28: #{tpu_custom_call.1} parent=1 // pred_region
      _
    $region29: #{tpu_custom_call.1} parent=1 // pred_fallthru
      _
    %v27 = vld [vmem:[%s0] sm:$0xff]
    %v28 = vld [vmem:[%s0 + $0x8] sm:$0xff]
    %v29 = vld [vmem:[%s0 + $0x10] sm:$0xff]
    %v30 = vld [vmem:[%s0 + $0x18] sm:$0xff]
    %v31 = vld [vmem:[%s0 + $0x20] sm:$0xff]
    %v32 = vld [vmem:[%s0 + $0x28] sm:$0xff]
    %v33 = vld [vmem:[%s0 + $0x30] sm:$0xff]
    %v34 = vld [vmem:[%s0 + $0x38] sm:$0xff]
    %v35 = vld [vmem:[%s1] sm:$0xff]
    %v36 = vld [vmem:[%s2] sm:$0x1]
    %v38 = vlaneseq
    %v39 = vshrl.u32 %v38, 7
    %v40 = vsub.s32 0, %v39
    %v41 = vrot.slane %v36, %v40
    %vm43 = vcmask 64512
    %v45 = vsel %vm43, %v27, 0
    %v48 = vsel %vm43, %v28, 0
    %v51 = vsel %vm43, %v29, 0
    %v54 = vsel %vm43, %v30, 0
    %v57 = vsel %vm43, %v31, 0
    %v60 = vsel %vm43, %v32, 0
    %v63 = vsel %vm43, %v33, 0
    %v66 = vsel %vm43, %v34, 0
    %68 = vmatprep.subr.mxu0 0.0
    %69 = vmatpush1.msra.mxu0 %v35
    %70 = vmatprep.subr.mxu0 0.0
    %71 = vmatpush1.msra.mxu0 0.0
    %72 = vmatprep.subr.mxu0 0.0
    %73 = vmatpush1.msra.mxu0 0.0
    %74 = vmatprep.subr.mxu0 0.0
    %75 = vmatpush1.msra.mxu0 0.0
    %76 = vmatprep.subr.mxu0 0.0
    %77 = vmatpush1.msra.mxu0 0.0
    %78 = vmatprep.subr.mxu0 0.0
    %79 = vmatpush1.msra.mxu0 0.0
    %80 = vmatprep.subr.mxu0 0.0
    %81 = vmatpush1.msra.mxu0 0.0
    %82 = vmatprep.subr.mxu0 0.0
    %83 = vmatpush1.msra.mxu0 0.0
    %84 = vmatprep.subr.mxu0 0.0
    %85 = vmatpush1.msra.mxu0 0.0
    %86 = vmatprep.subr.mxu0 0.0
    %87 = vmatpush1.msra.mxu0 0.0
    %88 = vmatprep.subr.mxu0 0.0
    %89 = vmatpush1.msra.mxu0 0.0
    %90 = vmatprep.subr.mxu0 0.0
    %91 = vmatpush1.msra.mxu0 0.0
    %92 = vmatprep.subr.mxu0 0.0
    %93 = vmatpush1.msra.mxu0 0.0
    %94 = vmatprep.subr.mxu0 0.0
    %95 = vmatpush1.msra.mxu0 0.0
    %96 = vmatprep.subr.mxu0 0.0
    %97 = vmatpush1.msra.mxu0 0.0
    %98 = vmatprep.subr.mxu0 0.0
    %99 = vmatpush1.msra.mxu0 0.0
    %100 = vmatprep.subr.mxu0 0.0
    %101 = vmatpush1.msra.mxu0 0.0
    %102 = vmatprep.subr.mxu0 0.0
    %103 = vmatpush1.msra.mxu0 0.0
    %104 = vmatprep.subr.mxu0 0.0
    %105 = vmatpush1.msra.mxu0 0.0
    %106 = vmatprep.subr.mxu0 0.0
    %107 = vmatpush1.msra.mxu0 0.0
    %108 = vmatprep.subr.mxu0 0.0
    %109 = vmatpush1.msra.mxu0 0.0
    %110 = vmatprep.subr.mxu0 0.0
    %111 = vmatpush1.msra.mxu0 0.0
    %112 = vmatprep.subr.mxu0 0.0
    %113 = vmatpush1.msra.mxu0 0.0
    %114 = vmatprep.subr.mxu0 0.0
    %115 = vmatpush1.msra.mxu0 0.0
    %116 = vmatprep.subr.mxu0 0.0
    %117 = vmatpush1.msra.mxu0 0.0
    %118 = vmatprep.subr.mxu0 0.0
    %119 = vmatpush1.msra.mxu0 0.0
    %120 = vmatprep.subr.mxu0 0.0
    %121 = vmatpush1.msra.mxu0 0.0
    %122 = vmatprep.subr.mxu0 0.0
    %123 = vmatpush1.msra.mxu0 0.0
    %124 = vmatprep.subr.mxu0 0.0
    %125 = vmatpush1.msra.mxu0 0.0
    %126 = vmatprep.subr.mxu0 0.0
    %127 = vmatpush1.msra.mxu0 0.0
    %128 = vmatprep.subr.mxu0 0.0
    %129 = vmatpush1.msra.mxu0 0.0
    %130 = vmatprep.subr.mxu0 0.0
    %131 = vmatpush1.msra.mxu0 0.0
    %132 = vmatprep.mubr.f32.mxu0 0.0
    %133 = vmatmul.mubr.f32.gmra.mrb[0].mxu0 %v45
    %v134 = vpop.f32.mrb[0].mxu0
    %v135 = vadd.f32 %v41, %v134
    %v136 = vpop.f32.mrb[0].mxu0
    %137 = vmatprep.mubr.f32.mxu0 0.0
    %138 = vmatmul.mubr.f32.gmra.mrb[0].mxu0 %v48
    %v139 = vpop.f32.mrb[0].mxu0
    %v140 = vadd.f32 %v41, %v139
    %v141 = vpop.f32.mrb[0].mxu0
    %142 = vmatprep.mubr.f32.mxu0 0.0
    %143 = vmatmul.mubr.f32.gmra.mrb[0].mxu0 %v51
    %v144 = vpop.f32.mrb[0].mxu0
    %v145 = vadd.f32 %v41, %v144
    %v146 = vpop.f32.mrb[0].mxu0
    %147 = vmatprep.mubr.f32.mxu0 0.0
    %148 = vmatmul.mubr.f32.gmra.mrb[0].mxu0 %v54
    %v149 = vpop.f32.mrb[0].mxu0
    %v150 = vadd.f32 %v41, %v149
    %v151 = vpop.f32.mrb[0].mxu0
    %152 = vmatprep.mubr.f32.mxu0 0.0
    %153 = vmatmul.mubr.f32.gmra.mrb[0].mxu0 %v57
    %v154 = vpop.f32.mrb[0].mxu0
    %v155 = vadd.f32 %v41, %v154
    %v156 = vpop.f32.mrb[0].mxu0
    %157 = vmatprep.mubr.f32.mxu0 0.0
    %158 = vmatmul.mubr.f32.gmra.mrb[0].mxu0 %v60
    %v159 = vpop.f32.mrb[0].mxu0
    %v160 = vadd.f32 %v41, %v159
    %v161 = vpop.f32.mrb[0].mxu0
    %162 = vmatprep.mubr.f32.mxu0 0.0
    %163 = vmatmul.mubr.f32.gmra.mrb[0].mxu0 %v63
    %v164 = vpop.f32.mrb[0].mxu0
    %v165 = vadd.f32 %v41, %v164
    %v166 = vpop.f32.mrb[0].mxu0
    %167 = vmatprep.mubr.f32.mxu0 0.0
    %168 = vmatmul.mubr.f32.gmra.mrb[0].mxu0 %v66
    %v169 = vpop.f32.mrb[0].mxu0
    %v170 = vadd.f32 %v41, %v169
    %v171 = vpop.f32.mrb[0].mxu0
    %172 = vdwg.mxu0
    %vm173 = vcmp.gt.f32.partialorder %v135, 0.0
    %vm174 = vcmp.gt.f32.partialorder %v140, 0.0
    %vm175 = vcmp.gt.f32.partialorder %v145, 0.0
    %vm176 = vcmp.gt.f32.partialorder %v150, 0.0
    %vm177 = vcmp.gt.f32.partialorder %v155, 0.0
    %vm178 = vcmp.gt.f32.partialorder %v160, 0.0
    %vm179 = vcmp.gt.f32.partialorder %v165, 0.0
    %vm180 = vcmp.gt.f32.partialorder %v170, 0.0
    %v181 = vmul.f32 %v135, 0.2
    %v182 = vmul.f32 %v140, 0.2
    %v183 = vmul.f32 %v145, 0.2
    %v184 = vmul.f32 %v150, 0.2
    %v185 = vmul.f32 %v155, 0.2
    %v186 = vmul.f32 %v160, 0.2
    %v187 = vmul.f32 %v165, 0.2
    %v188 = vmul.f32 %v170, 0.2
    %v189 = vsel %vm173, %v135, %v181
    %v190 = vsel %vm174, %v140, %v182
    %v191 = vsel %vm175, %v145, %v183
    %v192 = vsel %vm176, %v150, %v184
    %v193 = vsel %vm177, %v155, %v185
    %v194 = vsel %vm178, %v160, %v186
    %v195 = vsel %vm179, %v165, %v187
    %v196 = vsel %vm180, %v170, %v188
    %v197 = vld [vmem:[%s3] sm:$0xff]
    %v198 = vld [vmem:[%s3 + $0x8] sm:$0xff]
    %v199 = vld [vmem:[%s3 + $0x10] sm:$0xff]
    %v200 = vld [vmem:[%s3 + $0x18] sm:$0xff]
    %v201 = vld [vmem:[%s4] sm:$0x1]
    %v203 = vlaneseq
    %v204 = vshrl.u32 %v203, 7
    %v205 = vsub.s32 0, %v204
    %v206 = vrot.slane %v201, %v205
    %vm208 = vcmask 261120
    %v210 = vsel %vm208, %v189, 0
    %v213 = vsel %vm208, %v190, 0
    %v216 = vsel %vm208, %v191, 0
    %v219 = vsel %vm208, %v192, 0
    %v222 = vsel %vm208, %v193, 0
    %v225 = vsel %vm208, %v194, 0
    %v228 = vsel %vm208, %v195, 0
    %v231 = vsel %vm208, %v196, 0
    %233 = vmatprep.subr.mxu0 0.0
    %234 = vmatpush1.msra.mxu0 %v197
    %235 = vmatprep.subr.mxu0 0.0
    %236 = vmatpush1.msra.mxu0 %v198
    %237 = vmatprep.subr.mxu0 0.0
    %238 = vmatpush1.msra.mxu0 %v199
    %239 = vmatprep.subr.mxu0 0.0
    %240 = vmatpush1.msra.mxu0 %v200
    %241 = vmatprep.subr.mxu0 0.0
    %242 = vmatpush1.msra.mxu0 0.0
    %243 = vmatprep.subr.mxu0 0.0
    %244 = vmatpush1.msra.mxu0 0.0
    %245 = vmatprep.subr.mxu0 0.0
    %246 = vmatpush1.msra.mxu0 0.0
    %247 = vmatprep.subr.mxu0 0.0
    %248 = vmatpush1.msra.mxu0 0.0
    %249 = vmatprep.subr.mxu0 0.0
    %250 = vmatpush1.msra.mxu0 0.0
    %251 = vmatprep.subr.mxu0 0.0
    %252 = vmatpush1.msra.mxu0 0.0
    %253 = vmatprep.subr.mxu0 0.0
    %254 = vmatpush1.msra.mxu0 0.0
    %255 = vmatprep.subr.mxu0 0.0
    %256 = vmatpush1.msra.mxu0 0.0
    %257 = vmatprep.subr.mxu0 0.0
    %258 = vmatpush1.msra.mxu0 0.0
    %259 = vmatprep.subr.mxu0 0.0
    %260 = vmatpush1.msra.mxu0 0.0
    %261 = vmatprep.subr.mxu0 0.0
    %262 = vmatpush1.msra.mxu0 0.0
    %263 = vmatprep.subr.mxu0 0.0
    %264 = vmatpush1.msra.mxu0 0.0
    %265 = vmatprep.subr.mxu0 0.0
    %266 = vmatpush1.msra.mxu0 0.0
    %267 = vmatprep.subr.mxu0 0.0
    %268 = vmatpush1.msra.mxu0 0.0
    %269 = vmatprep.subr.mxu0 0.0
    %270 = vmatpush1.msra.mxu0 0.0
    %271 = vmatprep.subr.mxu0 0.0
    %272 = vmatpush1.msra.mxu0 0.0
    %273 = vmatprep.subr.mxu0 0.0
    %274 = vmatpush1.msra.mxu0 0.0
    %275 = vmatprep.subr.mxu0 0.0
    %276 = vmatpush1.msra.mxu0 0.0
    %277 = vmatprep.subr.mxu0 0.0
    %278 = vmatpush1.msra.mxu0 0.0
    %279 = vmatprep.subr.mxu0 0.0
    %280 = vmatpush1.msra.mxu0 0.0
    %281 = vmatprep.subr.mxu0 0.0
    %282 = vmatpush1.msra.mxu0 0.0
    %283 = vmatprep.subr.mxu0 0.0
    %284 = vmatpush1.msra.mxu0 0.0
    %285 = vmatprep.subr.mxu0 0.0
    %286 = vmatpush1.msra.mxu0 0.0
    %287 = vmatprep.subr.mxu0 0.0
    %288 = vmatpush1.msra.mxu0 0.0
    %289 = vmatprep.subr.mxu0 0.0
    %290 = vmatpush1.msra.mxu0 0.0
    %291 = vmatprep.subr.mxu0 0.0
    %292 = vmatpush1.msra.mxu0 0.0
    %293 = vmatprep.subr.mxu0 0.0
    %294 = vmatpush1.msra.mxu0 0.0
    %295 = vmatprep.subr.mxu0 0.0
    %296 = vmatpush1.msra.mxu0 0.0
    %297 = vmatprep.mubr.f32.mxu0 0.0
    %298 = vmatmul.mubr.f32.gmra.mrb[0].mxu0 %v210
    %v299 = vpop.f32.mrb[0].mxu0
    %v300 = vadd.f32 %v206, %v299
    %v301 = vpop.f32.mrb[0].mxu0
    %302 = vmatprep.mubr.f32.mxu0 0.0
    %303 = vmatmul.mubr.f32.gmra.mrb[0].mxu0 %v213
    %v304 = vpop.f32.mrb[0].mxu0
    %v305 = vadd.f32 %v206, %v304
    %v306 = vpop.f32.mrb[0].mxu0
    %307 = vmatprep.mubr.f32.mxu0 0.0
    %308 = vmatmul.mubr.f32.gmra.mrb[0].mxu0 %v216
    %v309 = vpop.f32.mrb[0].mxu0
    %v310 = vadd.f32 %v206, %v309
    %v311 = vpop.f32.mrb[0].mxu0
    %312 = vmatprep.mubr.f32.mxu0 0.0
    %313 = vmatmul.mubr.f32.gmra.mrb[0].mxu0 %v219
    %v314 = vpop.f32.mrb[0].mxu0
    %v315 = vadd.f32 %v206, %v314
    %v316 = vpop.f32.mrb[0].mxu0
    %317 = vmatprep.mubr.f32.mxu0 0.0
    %318 = vmatmul.mubr.f32.gmra.mrb[0].mxu0 %v222
    %v319 = vpop.f32.mrb[0].mxu0
    %v320 = vadd.f32 %v206, %v319
    %v321 = vpop.f32.mrb[0].mxu0
    %322 = vmatprep.mubr.f32.mxu0 0.0
    %323 = vmatmul.mubr.f32.gmra.mrb[0].mxu0 %v225
    %v324 = vpop.f32.mrb[0].mxu0
    %v325 = vadd.f32 %v206, %v324
    %v326 = vpop.f32.mrb[0].mxu0
    %327 = vmatprep.mubr.f32.mxu0 0.0
    %328 = vmatmul.mubr.f32.gmra.mrb[0].mxu0 %v228
    %v329 = vpop.f32.mrb[0].mxu0
    %v330 = vadd.f32 %v206, %v329
    %v331 = vpop.f32.mrb[0].mxu0
    %332 = vmatprep.mubr.f32.mxu0 0.0
    %333 = vmatmul.mubr.f32.gmra.mrb[0].mxu0 %v231
    %v334 = vpop.f32.mrb[0].mxu0
    %v335 = vadd.f32 %v206, %v334
    %v336 = vpop.f32.mrb[0].mxu0
    %337 = vdwg.mxu0
    %vm338 = vcmask 277760
    %v339 = vsel %vm338, %v300, -inf
    %v340 = vrot.slane %v339, 4
    %v341 = vmax.f32 %v339, %v340
    %v342 = vrot.slane %v341, 2
    %v343 = vmax.f32 %v341, %v342
    %v344 = vrot.slane %v343, 1
    %v345 = vmax.f32 %v343, %v344
    %v346 = vsel %vm338, %v305, -inf
    %v347 = vrot.slane %v346, 4
    %v348 = vmax.f32 %v346, %v347
    %v349 = vrot.slane %v348, 2
    %v350 = vmax.f32 %v348, %v349
    %v351 = vrot.slane %v350, 1
    %v352 = vmax.f32 %v350, %v351
    %v353 = vsel %vm338, %v310, -inf
    %v354 = vrot.slane %v353, 4
    %v355 = vmax.f32 %v353, %v354
    %v356 = vrot.slane %v355, 2
    %v357 = vmax.f32 %v355, %v356
    %v358 = vrot.slane %v357, 1
    %v359 = vmax.f32 %v357, %v358
    %v360 = vsel %vm338, %v315, -inf
    %v361 = vrot.slane %v360, 4
    %v362 = vmax.f32 %v360, %v361
    %v363 = vrot.slane %v362, 2
    %v364 = vmax.f32 %v362, %v363
    %v365 = vrot.slane %v364, 1
    %v366 = vmax.f32 %v364, %v365
    %v367 = vsel %vm338, %v320, -inf
    %v368 = vrot.slane %v367, 4
    %v369 = vmax.f32 %v367, %v368
    %v370 = vrot.slane %v369, 2
    %v371 = vmax.f32 %v369, %v370
    %v372 = vrot.slane %v371, 1
    %v373 = vmax.f32 %v371, %v372
    %v374 = vsel %vm338, %v325, -inf
    %v375 = vrot.slane %v374, 4
    %v376 = vmax.f32 %v374, %v375
    %v377 = vrot.slane %v376, 2
    %v378 = vmax.f32 %v376, %v377
    %v379 = vrot.slane %v378, 1
    %v380 = vmax.f32 %v378, %v379
    %v381 = vsel %vm338, %v330, -inf
    %v382 = vrot.slane %v381, 4
    %v383 = vmax.f32 %v381, %v382
    %v384 = vrot.slane %v383, 2
    %v385 = vmax.f32 %v383, %v384
    %v386 = vrot.slane %v385, 1
    %v387 = vmax.f32 %v385, %v386
    %v388 = vsel %vm338, %v335, -inf
    %v389 = vrot.slane %v388, 4
    %v390 = vmax.f32 %v388, %v389
    %v391 = vrot.slane %v390, 2
    %v392 = vmax.f32 %v390, %v391
    %v393 = vrot.slane %v392, 1
    %v394 = vmax.f32 %v392, %v393
    %v395 = vsub.f32 %v300, %v345
    %v396 = vsub.f32 %v305, %v352
    %v397 = vsub.f32 %v310, %v359
    %v398 = vsub.f32 %v315, %v366
    %v399 = vsub.f32 %v320, %v373
    %v400 = vsub.f32 %v325, %v380
    %v401 = vsub.f32 %v330, %v387
    %v402 = vsub.f32 %v335, %v394
    %v403 = vmul.f32 %v395, 1.442695
    %v404 = vpow.pop %v403
    %v405 = vmul.f32 %v396, 1.442695
    %v406 = vpow.pop %v405
    %v407 = vmul.f32 %v397, 1.442695
    %v408 = vpow.pop %v407
    %v409 = vmul.f32 %v398, 1.442695
    %v410 = vpow.pop %v409
    %v411 = vmul.f32 %v399, 1.442695
    %v412 = vpow.pop %v411
    %v413 = vmul.f32 %v400, 1.442695
    %v414 = vpow.pop %v413
    %v415 = vmul.f32 %v401, 1.442695
    %v416 = vpow.pop %v415
    %v417 = vmul.f32 %v402, 1.442695
    %v418 = vpow.pop %v417
    %v419 = vsel %vm338, %v404, 0.0
    %v420 = vrot.slane %v419, 4
    %v421 = vadd.f32 %v419, %v420
    %v422 = vrot.slane %v421, 2
    %v423 = vadd.f32 %v421, %v422
    %v424 = vrot.slane %v423, 1
    %v425 = vadd.f32 %v423, %v424
    %v426 = vsel %vm338, %v406, 0.0
    %v427 = vrot.slane %v426, 4
    %v428 = vadd.f32 %v426, %v427
    %v429 = vrot.slane %v428, 2
    %v430 = vadd.f32 %v428, %v429
    %v431 = vrot.slane %v430, 1
    %v432 = vadd.f32 %v430, %v431
    %v433 = vsel %vm338, %v408, 0.0
    %v434 = vrot.slane %v433, 4
    %v435 = vadd.f32 %v433, %v434
    %v436 = vrot.slane %v435, 2
    %v437 = vadd.f32 %v435, %v436
    %v438 = vrot.slane %v437, 1
    %v439 = vadd.f32 %v437, %v438
    %v440 = vsel %vm338, %v410, 0.0
    %v441 = vrot.slane %v440, 4
    %v442 = vadd.f32 %v440, %v441
    %v443 = vrot.slane %v442, 2
    %v444 = vadd.f32 %v442, %v443
    %v445 = vrot.slane %v444, 1
    %v446 = vadd.f32 %v444, %v445
    %v447 = vsel %vm338, %v412, 0.0
    %v448 = vrot.slane %v447, 4
    %v449 = vadd.f32 %v447, %v448
    %v450 = vrot.slane %v449, 2
    %v451 = vadd.f32 %v449, %v450
    %v452 = vrot.slane %v451, 1
    %v453 = vadd.f32 %v451, %v452
    %v454 = vsel %vm338, %v414, 0.0
    %v455 = vrot.slane %v454, 4
    %v456 = vadd.f32 %v454, %v455
    %v457 = vrot.slane %v456, 2
    %v458 = vadd.f32 %v456, %v457
    %v459 = vrot.slane %v458, 1
    %v460 = vadd.f32 %v458, %v459
    %v461 = vsel %vm338, %v416, 0.0
    %v462 = vrot.slane %v461, 4
    %v463 = vadd.f32 %v461, %v462
    %v464 = vrot.slane %v463, 2
    %v465 = vadd.f32 %v463, %v464
    %v466 = vrot.slane %v465, 1
    %v467 = vadd.f32 %v465, %v466
    %v468 = vsel %vm338, %v418, 0.0
    %v469 = vrot.slane %v468, 4
    %v470 = vadd.f32 %v468, %v469
    %v471 = vrot.slane %v470, 2
    %v472 = vadd.f32 %v470, %v471
    %v473 = vrot.slane %v472, 1
    %v474 = vadd.f32 %v472, %v473
    %v475 = vrcp.pop %v425
    %v476 = vrcp.pop %v432
    %v477 = vrcp.pop %v439
    %v478 = vrcp.pop %v446
    %v479 = vrcp.pop %v453
    %v480 = vrcp.pop %v460
    %v481 = vrcp.pop %v467
    %v482 = vrcp.pop %v474
    %v483 = vmul.f32 %v404, %v475
    %v484 = vmul.f32 %v406, %v476
    %v485 = vmul.f32 %v408, %v477
    %v486 = vmul.f32 %v410, %v478
    %v487 = vmul.f32 %v412, %v479
    %v488 = vmul.f32 %v414, %v480
    %v489 = vmul.f32 %v416, %v481
    %v490 = vmul.f32 %v418, %v482
    %492 = vset.pattern.permute.xlu0 32
    %493 = vperm.xlu0 %492, %v483
    %v494 = vpop.permute.xlu0 %493
    %497 = vset.pattern.permute.xlu0 32
    %498 = vperm.xlu0 %497, %v484
    %v499 = vpop.permute.xlu0 %498
    %502 = vset.pattern.permute.xlu0 32
    %503 = vperm.xlu0 %502, %v485
    %v504 = vpop.permute.xlu0 %503
    %507 = vset.pattern.permute.xlu0 32
    %508 = vperm.xlu0 %507, %v486
    %v509 = vpop.permute.xlu0 %508
    %512 = vset.pattern.permute.xlu0 32
    %513 = vperm.xlu0 %512, %v487
    %v514 = vpop.permute.xlu0 %513
    %517 = vset.pattern.permute.xlu0 32
    %518 = vperm.xlu0 %517, %v488
    %v519 = vpop.permute.xlu0 %518
    %522 = vset.pattern.permute.xlu0 32
    %523 = vperm.xlu0 %522, %v489
    %v524 = vpop.permute.xlu0 %523
    %527 = vset.pattern.permute.xlu0 32
    %528 = vperm.xlu0 %527, %v490
    %v529 = vpop.permute.xlu0 %528
    %v531 = vmul.f32 %v494, %v300
    %v532 = vmul.f32 %v499, %v305
    %v533 = vmul.f32 %v504, %v310
    %v534 = vmul.f32 %v509, %v315
    %v535 = vmul.f32 %v514, %v320
    %v536 = vmul.f32 %v519, %v325
    %v537 = vmul.f32 %v524, %v330
    %v538 = vmul.f32 %v529, %v335
    %v539 = vsel %vm208, %v531, 0.0
    %v540 = vrot.slane %v539, 4
    %v541 = vadd.f32 %v539, %v540
    %v542 = vrot.slane %v541, 2
    %v543 = vadd.f32 %v541, %v542
    %v544 = vrot.slane %v543, 1
    %v545 = vadd.f32 %v543, %v544
    %v546 = vsel %vm208, %v532, 0.0
    %v547 = vrot.slane %v546, 4
    %v548 = vadd.f32 %v546, %v547
    %v549 = vrot.slane %v548, 2
    %v550 = vadd.f32 %v548, %v549
    %v551 = vrot.slane %v550, 1
    %v552 = vadd.f32 %v550, %v551
    %v553 = vsel %vm208, %v533, 0.0
    %v554 = vrot.slane %v553, 4
    %v555 = vadd.f32 %v553, %v554
    %v556 = vrot.slane %v555, 2
    %v557 = vadd.f32 %v555, %v556
    %v558 = vrot.slane %v557, 1
    %v559 = vadd.f32 %v557, %v558
    %v560 = vsel %vm208, %v534, 0.0
    %v561 = vrot.slane %v560, 4
    %v562 = vadd.f32 %v560, %v561
    %v563 = vrot.slane %v562, 2
    %v564 = vadd.f32 %v562, %v563
    %v565 = vrot.slane %v564, 1
    %v566 = vadd.f32 %v564, %v565
    %v567 = vsel %vm208, %v535, 0.0
    %v568 = vrot.slane %v567, 4
    %v569 = vadd.f32 %v567, %v568
    %v570 = vrot.slane %v569, 2
    %v571 = vadd.f32 %v569, %v570
    %v572 = vrot.slane %v571, 1
    %v573 = vadd.f32 %v571, %v572
    %v574 = vsel %vm208, %v536, 0.0
    %v575 = vrot.slane %v574, 4
    %v576 = vadd.f32 %v574, %v575
    %v577 = vrot.slane %v576, 2
    %v578 = vadd.f32 %v576, %v577
    %v579 = vrot.slane %v578, 1
    %v580 = vadd.f32 %v578, %v579
    %v581 = vsel %vm208, %v537, 0.0
    %v582 = vrot.slane %v581, 4
    %v583 = vadd.f32 %v581, %v582
    %v584 = vrot.slane %v583, 2
    %v585 = vadd.f32 %v583, %v584
    %v586 = vrot.slane %v585, 1
    %v587 = vadd.f32 %v585, %v586
    %v588 = vsel %vm208, %v538, 0.0
    %v589 = vrot.slane %v588, 4
    %v590 = vadd.f32 %v588, %v589
    %v591 = vrot.slane %v590, 2
    %v592 = vadd.f32 %v590, %v591
    %v593 = vrot.slane %v592, 1
    %v594 = vadd.f32 %v592, %v593
    %595 = vset.pattern.permute.xlu0 33
    %596 = vperm.xlu0 %595, %v483
    %v597 = vpop.permute.xlu0 %596
    %599 = vset.pattern.permute.xlu0 33
    %600 = vperm.xlu0 %599, %v484
    %v601 = vpop.permute.xlu0 %600
    %603 = vset.pattern.permute.xlu0 33
    %604 = vperm.xlu0 %603, %v485
    %v605 = vpop.permute.xlu0 %604
    %607 = vset.pattern.permute.xlu0 33
    %608 = vperm.xlu0 %607, %v486
    %v609 = vpop.permute.xlu0 %608
    %611 = vset.pattern.permute.xlu0 33
    %612 = vperm.xlu0 %611, %v487
    %v613 = vpop.permute.xlu0 %612
    %615 = vset.pattern.permute.xlu0 33
    %616 = vperm.xlu0 %615, %v488
    %v617 = vpop.permute.xlu0 %616
    %619 = vset.pattern.permute.xlu0 33
    %620 = vperm.xlu0 %619, %v489
    %v621 = vpop.permute.xlu0 %620
    %623 = vset.pattern.permute.xlu0 33
    %624 = vperm.xlu0 %623, %v490
    %v625 = vpop.permute.xlu0 %624
    %v627 = vmul.f32 %v597, %v300
    %v628 = vmul.f32 %v601, %v305
    %v629 = vmul.f32 %v605, %v310
    %v630 = vmul.f32 %v609, %v315
    %v631 = vmul.f32 %v613, %v320
    %v632 = vmul.f32 %v617, %v325
    %v633 = vmul.f32 %v621, %v330
    %v634 = vmul.f32 %v625, %v335
    %v635 = vsel %vm208, %v627, 0.0
    %v636 = vrot.slane %v635, 4
    %v637 = vadd.f32 %v635, %v636
    %v638 = vrot.slane %v637, 2
    %v639 = vadd.f32 %v637, %v638
    %v640 = vrot.slane %v639, 1
    %v641 = vadd.f32 %v639, %v640
    %v642 = vsel %vm208, %v628, 0.0
    %v643 = vrot.slane %v642, 4
    %v644 = vadd.f32 %v642, %v643
    %v645 = vrot.slane %v644, 2
    %v646 = vadd.f32 %v644, %v645
    %v647 = vrot.slane %v646, 1
    %v648 = vadd.f32 %v646, %v647
    %v649 = vsel %vm208, %v629, 0.0
    %v650 = vrot.slane %v649, 4
    %v651 = vadd.f32 %v649, %v650
    %v652 = vrot.slane %v651, 2
    %v653 = vadd.f32 %v651, %v652
    %v654 = vrot.slane %v653, 1
    %v655 = vadd.f32 %v653, %v654
    %v656 = vsel %vm208, %v630, 0.0
    %v657 = vrot.slane %v656, 4
    %v658 = vadd.f32 %v656, %v657
    %v659 = vrot.slane %v658, 2
    %v660 = vadd.f32 %v658, %v659
    %v661 = vrot.slane %v660, 1
    %v662 = vadd.f32 %v660, %v661
    %v663 = vsel %vm208, %v631, 0.0
    %v664 = vrot.slane %v663, 4
    %v665 = vadd.f32 %v663, %v664
    %v666 = vrot.slane %v665, 2
    %v667 = vadd.f32 %v665, %v666
    %v668 = vrot.slane %v667, 1
    %v669 = vadd.f32 %v667, %v668
    %v670 = vsel %vm208, %v632, 0.0
    %v671 = vrot.slane %v670, 4
    %v672 = vadd.f32 %v670, %v671
    %v673 = vrot.slane %v672, 2
    %v674 = vadd.f32 %v672, %v673
    %v675 = vrot.slane %v674, 1
    %v676 = vadd.f32 %v674, %v675
    %v677 = vsel %vm208, %v633, 0.0
    %v678 = vrot.slane %v677, 4
    %v679 = vadd.f32 %v677, %v678
    %v680 = vrot.slane %v679, 2
    %v681 = vadd.f32 %v679, %v680
    %v682 = vrot.slane %v681, 1
    %v683 = vadd.f32 %v681, %v682
    %v684 = vsel %vm208, %v634, 0.0
    %v685 = vrot.slane %v684, 4
    %v686 = vadd.f32 %v684, %v685
    %v687 = vrot.slane %v686, 2
    %v688 = vadd.f32 %v686, %v687
    %v689 = vrot.slane %v688, 1
    %v690 = vadd.f32 %v688, %v689
    %vm699 = vcmask 1041409
    %v700 = vsel %vm699, %v552, %v545
    %vm701 = vcmask 1042434
    %v702 = vsel %vm701, %v559, %v700
    %vm703 = vcmask 1043459
    %v704 = vsel %vm703, %v566, %v702
    %vm705 = vcmask 1044484
    %v706 = vsel %vm705, %v573, %v704
    %vm707 = vcmask 1045509
    %v708 = vsel %vm707, %v580, %v706
    %vm709 = vcmask 1046534
    %v710 = vsel %vm709, %v587, %v708
    %vm711 = vcmask 1047559
    %v712 = vsel %vm711, %v594, %v710
    %v722 = vsel %vm699, %v648, %v641
    %v723 = vsel %vm701, %v655, %v722
    %v724 = vsel %vm703, %v662, %v723
    %v725 = vsel %vm705, %v669, %v724
    %v726 = vsel %vm707, %v676, %v725
    %v727 = vsel %vm709, %v683, %v726
    %v728 = vsel %vm711, %v690, %v727
    %729 = vrot.lane.b32.xlu0 %v728, 32
    %v730 = vpop.permute.xlu0 %729
    %v732 = vsel %vm208, %v712, %v730
    %v733 = vld [vmem:[%s5] sm:$0xff]
    %v734 = vld [vmem:[%s5 + $0x8] sm:$0xff]
    %v735 = vld [vmem:[%s5 + $0x10] sm:$0xff]
    %v736 = vld [vmem:[%s5 + $0x18] sm:$0xff]
    %v737 = vld [vmem:[%s5 + $0x20] sm:$0xff]
    %v738 = vld [vmem:[%s5 + $0x28] sm:$0xff]
    %v739 = vld [vmem:[%s5 + $0x30] sm:$0xff]
    %v740 = vld [vmem:[%s5 + $0x38] sm:$0xff]
    %v741 = vld [vmem:[%s6] sm:$0x1]
    %v743 = vlaneseq
    %v744 = vshrl.u32 %v743, 7
    %v745 = vsub.s32 0, %v744
    %v746 = vrot.slane %v741, %v745
    %vm748 = vcmask 523264
    %v750 = vsel %vm748, %v732, 0
    %752 = vmatprep.subr.mxu0 0.0
    %753 = vmatpush1.msra.mxu0 %v733
    %754 = vmatprep.subr.mxu0 0.0
    %755 = vmatpush1.msra.mxu0 %v734
    %756 = vmatprep.subr.mxu0 0.0
    %757 = vmatpush1.msra.mxu0 %v735
    %758 = vmatprep.subr.mxu0 0.0
    %759 = vmatpush1.msra.mxu0 %v736
    %760 = vmatprep.subr.mxu0 0.0
    %761 = vmatpush1.msra.mxu0 %v737
    %762 = vmatprep.subr.mxu0 0.0
    %763 = vmatpush1.msra.mxu0 %v738
    %764 = vmatprep.subr.mxu0 0.0
    %765 = vmatpush1.msra.mxu0 %v739
    %766 = vmatprep.subr.mxu0 0.0
    %767 = vmatpush1.msra.mxu0 %v740
    %768 = vmatprep.subr.mxu0 0.0
    %769 = vmatpush1.msra.mxu0 0.0
    %770 = vmatprep.subr.mxu0 0.0
    %771 = vmatpush1.msra.mxu0 0.0
    %772 = vmatprep.subr.mxu0 0.0
    %773 = vmatpush1.msra.mxu0 0.0
    %774 = vmatprep.subr.mxu0 0.0
    %775 = vmatpush1.msra.mxu0 0.0
    %776 = vmatprep.subr.mxu0 0.0
    %777 = vmatpush1.msra.mxu0 0.0
    %778 = vmatprep.subr.mxu0 0.0
    %779 = vmatpush1.msra.mxu0 0.0
    %780 = vmatprep.subr.mxu0 0.0
    %781 = vmatpush1.msra.mxu0 0.0
    %782 = vmatprep.subr.mxu0 0.0
    %783 = vmatpush1.msra.mxu0 0.0
    %784 = vmatprep.subr.mxu0 0.0
    %785 = vmatpush1.msra.mxu0 0.0
    %786 = vmatprep.subr.mxu0 0.0
    %787 = vmatpush1.msra.mxu0 0.0
    %788 = vmatprep.subr.mxu0 0.0
    %789 = vmatpush1.msra.mxu0 0.0
    %790 = vmatprep.subr.mxu0 0.0
    %791 = vmatpush1.msra.mxu0 0.0
    %792 = vmatprep.subr.mxu0 0.0
    %793 = vmatpush1.msra.mxu0 0.0
    %794 = vmatprep.subr.mxu0 0.0
    %795 = vmatpush1.msra.mxu0 0.0
    %796 = vmatprep.subr.mxu0 0.0
    %797 = vmatpush1.msra.mxu0 0.0
    %798 = vmatprep.subr.mxu0 0.0
    %799 = vmatpush1.msra.mxu0 0.0
    %800 = vmatprep.subr.mxu0 0.0
    %801 = vmatpush1.msra.mxu0 0.0
    %802 = vmatprep.subr.mxu0 0.0
    %803 = vmatpush1.msra.mxu0 0.0
    %804 = vmatprep.subr.mxu0 0.0
    %805 = vmatpush1.msra.mxu0 0.0
    %806 = vmatprep.subr.mxu0 0.0
    %807 = vmatpush1.msra.mxu0 0.0
    %808 = vmatprep.subr.mxu0 0.0
    %809 = vmatpush1.msra.mxu0 0.0
    %810 = vmatprep.subr.mxu0 0.0
    %811 = vmatpush1.msra.mxu0 0.0
    %812 = vmatprep.subr.mxu0 0.0
    %813 = vmatpush1.msra.mxu0 0.0
    %814 = vmatprep.subr.mxu0 0.0
    %815 = vmatpush1.msra.mxu0 0.0
    %816 = vmatprep.mubr.f32.mxu0 0.0
    %817 = vmatmul.mubr.f32.gmra.mrb[0].mxu0 %v750
    %v818 = vpop.f32.mrb[0].mxu0
    %v819 = vadd.f32 %v746, %v818
    %v820 = vpop.f32.mrb[0].mxu0
    %821 = vdwg.mxu0
    %822 = vst.msk [vmem:[#allocation2] sm:$0xff] %vm208, %v819
    // Predicated region
    $region30: #{tpu_custom_call.1} parent=1 // pred_check
      _
    $region31: #{tpu_custom_call.1} parent=1 // pred_check_branch
      %824 = sbr.rel (0) target = $region33
    $region32: #{tpu_custom_call.1} parent=1 // pred_region
      %s826 = ssub.s32 128, 128
      %827 = vsyncadd [#allocation3], %s826
      %s829 = sshll.u32 [#allocation2], 4
      %s830 = int_to_ptr.vmem [resolvable:$true] %s829
      %832 = dma.vmem_to_hbm [thread:$0]  %s830, 128, %s7, [#allocation3]
    $region33: #{tpu_custom_call.1} parent=1 // pred_fallthru
      _
    // Predicated region
    $region34: #{tpu_custom_call.1} parent=1 // pred_check
      _
    $region35: #{tpu_custom_call.1} parent=1 // pred_check_branch
      %834 = sbr.rel (0) target = $region37
    $region36: #{tpu_custom_call.1} parent=1 // pred_region
      %835 = dma.done [#allocation3], 128
    $region37: #{tpu_custom_call.1} parent=1 // pred_fallthru
      _
    %836 = vsyncpa [#allocation3], 1

</llo_original>
